<compile_context>
chip_gen: v7x
topology: tpu7x:2x2x1
jax: 0.10.0
libtpu: 0.0.40
codegen_flags: <defaults>
</compile_context>

<pallas_src>
import numpy as np
import jax
import jax.numpy as jnp
from jax.experimental import pallas as pl
from jax.experimental.pallas import tpu as pltpu


def _round_up(a, b):
    return ((a + b - 1) // b) * b


def _make_ece_kernel(n_total, num_classes, inner_tiles, tile_n, nb_sub):
    C = int(num_classes)
    T = int(inner_tiles)
    TN = int(tile_n)

    def kernel(logits_ref, labels_ref, lowers_ref, uppers_ref,
               cnt_out, sconf_out, sacc_out,
               cnt_part, sconf_part, sacc_part):
        t = pl.program_id(1)

        @pl.when(t == 0)
        def _():
            cnt_part[...] = jnp.zeros_like(cnt_part)
            sconf_part[...] = jnp.zeros_like(sconf_part)
            sacc_part[...] = jnp.zeros_like(sacc_part)

        # logits arrive transposed: (C, TN) with the batch on the lane axis.
        x = logits_ref[...].astype(jnp.float32)                 # (C, TN)
        m = jnp.max(x, axis=0, keepdims=True)                    # (1, TN)
        s = jnp.sum(jnp.exp(x - m), axis=0, keepdims=True)       # (1, TN)
        # max(softmax) == exp(0)/sum == 1/sum  (exact divide; no approx recip,
        # it could flip bin membership on a boundary).
        conf = 1.0 / s                                            # (1, TN)
        # argmax(softmax) == argmax(logits); first-index tie-break.
        ids = jax.lax.broadcasted_iota(jnp.int32, x.shape, 0)
        pred = jnp.min(jnp.where(x == m, ids, C), axis=0, keepdims=True)
        acc = (pred == labels_ref[...]).astype(jnp.float32)       # (1, TN)

        # mask off rows that only exist because of batch padding
        tile_idx = pl.program_id(0) * T + t
        lane = jax.lax.broadcasted_iota(jnp.int32, (1, TN), 1)
        valid = ((tile_idx * TN + lane) < n_total).astype(jnp.float32)

        lo = lowers_ref[...]                                      # (NB_SUB, 1)
        hi = uppers_ref[...]                                      # (NB_SUB, 1)
        # (lo, hi] membership exactly as the torch reference; padded bins have
        # lo = hi = 2.0 so they never fire.
        in_bin = jnp.logical_and(conf > lo, conf <= hi).astype(jnp.float32)
        in_bin = in_bin * valid                                   # (NB_SUB, TN)

        cnt_part[...] += in_bin
        sconf_part[...] += in_bin * conf
        sacc_part[...] += in_bin * acc

        @pl.when(t == pl.num_programs(1) - 1)
        def _():
            cnt_out[...] = jnp.sum(cnt_part[...], axis=1, keepdims=True)
            sconf_out[...] = jnp.sum(sconf_part[...], axis=1, keepdims=True)
            sacc_out[...] = jnp.sum(sacc_part[...], axis=1, keepdims=True)

    return kernel


def ece_pallas(logits, labels, n_bins=10, tile_n=1024, num_splits=2):
    """ECE of `logits` [N, C] vs integer `labels` [N]. Returns shape-(1,) f32."""
    N, C = logits.shape
    NB_SUB = _round_up(max(n_bins, 8), 8)

    # Tile sizing: big lane-dense batch tiles; stays tiny in VMEM even on v7x
    # (block = C * TN * 4 B double-buffered + 3 * NB_SUB * TN * 4 B scratch).
    TN = min(_round_up(tile_n, 128), _round_up(N, 128))
    total_tiles = -(-N // TN)
    S = max(1, min(num_splits, total_tiles))       # outer "parallel" splits
    total_tiles = _round_up(total_tiles, S)
    N_pad = total_tiles * TN
    T = total_tiles // S

    # Batch-on-lanes layout (wrapper-side layout plumbing) + tail padding.
    logits_t = jnp.transpose(logits)               # (C, N)
    labels2 = labels.reshape(1, N).astype(jnp.int32)
    if N_pad != N:
        logits_t = jnp.pad(logits_t, ((0, 0), (0, N_pad - N)))
        labels2 = jnp.pad(labels2, ((0, 0), (0, N_pad - N)))

    # Bin boundaries (same as torch.linspace(0, 1, n_bins + 1)), passed as
    # inputs so the kernel does not capture traced constants.
    bounds = np.linspace(0.0, 1.0, n_bins + 1).astype(np.float32)
    lowers = np.full((NB_SUB, 1), 2.0, np.float32)
    uppers = np.full((NB_SUB, 1), 2.0, np.float32)
    lowers[:n_bins, 0] = bounds[:-1]
    uppers[:n_bins, 0] = bounds[1:]

    kernel = _make_ece_kernel(N, C, T, TN, NB_SUB)

    stat_shape = jax.ShapeDtypeStruct((S, NB_SUB, 1), jnp.float32)
    stat_spec = pl.BlockSpec((None, NB_SUB, 1), lambda s, t: (s, 0, 0))

    cnt, sconf, sacc = pl.pallas_call(
        kernel,
        out_shape=(stat_shape, stat_shape, stat_shape),
        grid_spec=pltpu.PrefetchScalarGridSpec(
            num_scalar_prefetch=0,
            grid=(S, T),
            in_specs=[
                pl.BlockSpec((C, TN), lambda s, t: (0, s * T + t)),
                pl.BlockSpec((1, TN), lambda s, t: (0, s * T + t)),
                pl.BlockSpec((NB_SUB, 1), lambda s, t: (0, 0)),
                pl.BlockSpec((NB_SUB, 1), lambda s, t: (0, 0)),
            ],
            out_specs=(stat_spec, stat_spec, stat_spec),
            scratch_shapes=[pltpu.VMEM((NB_SUB, TN), jnp.float32)] * 3,
        ),
        compiler_params=pltpu.CompilerParams(
            dimension_semantics=("parallel", "arbitrary")),
    )(logits_t, labels2, jnp.asarray(lowers), jnp.asarray(uppers))

    # Tiny final combine (global per-bin stats -> ECE scalar) in plain JAX.
    cnt_g = jnp.sum(cnt, axis=0)[:n_bins, 0]
    sconf_g = jnp.sum(sconf, axis=0)[:n_bins, 0]
    sacc_g = jnp.sum(sacc, axis=0)[:n_bins, 0]
    prop = cnt_g / float(N)
    denom = jnp.maximum(cnt_g, 1.0)
    ece = jnp.sum(jnp.where(cnt_g > 0.0,
                            jnp.abs(sconf_g / denom - sacc_g / denom) * prop,
                            0.0))
    return ece.reshape(1)  # matches torch.zeros(1)-shaped return


def ece_reference(logits, labels, n_bins=10):
    """Pure-JAX reference mirroring the PyTorch forward."""
    sm = jax.nn.softmax(logits.astype(jnp.float32), axis=1)
    conf = jnp.max(sm, axis=1)
    pred = jnp.argmax(sm, axis=1)
    acc = (pred == labels).astype(jnp.float32)
    bounds = np.linspace(0.0, 1.0, n_bins + 1).astype(np.float32)
    ece = jnp.zeros((1,), jnp.float32)
    n = conf.shape[0]
    for b in range(n_bins):
        lo, hi = float(bounds[b]), float(bounds[b + 1])
        in_bin = (conf > lo) & (conf <= hi)
        cnt = jnp.sum(in_bin.astype(jnp.float32))
        prop = cnt / n
        avg_acc = jnp.sum(jnp.where(in_bin, acc, 0.0)) / jnp.maximum(cnt, 1.0)
        avg_conf = jnp.sum(jnp.where(in_bin, conf, 0.0)) / jnp.maximum(cnt, 1.0)
        ece = ece + jnp.where(cnt > 0, jnp.abs(avg_conf - avg_acc) * prop, 0.0)
    return ece


if __name__ == "__main__":
    key = jax.random.PRNGKey(0)
    k1, k2 = jax.random.split(key)
    N, C = 128, 16  # small demo shapes: batch=128, classes=16
    logits = jax.random.normal(k1, (N, C), dtype=jnp.float32) * 2.0
    labels = jax.random.randint(k2, (N,), 0, C, dtype=jnp.int32)

    ece = ece_pallas(logits, labels, n_bins=10)
    jax.block_until_ready(ece)

    ref = ece_reference(logits, labels, n_bins=10)
    np.testing.assert_allclose(np.asarray(ece), np.asarray(ref),
                               rtol=1e-5, atol=1e-6)

    # TODO(synk): the module's host-side `print('ece = ', ece)` is intentionally omitted.
    print("KERNEL_OK")
</pallas_src>

<mosaic_0001>
module attributes {stable_mosaic.version = 11 : i64} {
  func.func @kernel(%arg0: i32, %arg1: i32, %arg2: memref<16x128xf32, #tpu.memory_space<vmem>>, %arg3: memref<1x128xi32, #tpu.memory_space<vmem>>, %arg4: memref<16x1xf32, #tpu.memory_space<vmem>>, %arg5: memref<16x1xf32, #tpu.memory_space<vmem>>, %arg6: memref<1x16x1xf32, #tpu.memory_space<vmem>>, %arg7: memref<1x16x1xf32, #tpu.memory_space<vmem>>, %arg8: memref<1x16x1xf32, #tpu.memory_space<vmem>>, %arg9: memref<16x128xf32, #tpu.memory_space<vmem>>, %arg10: memref<16x128xf32, #tpu.memory_space<vmem>>, %arg11: memref<16x128xf32, #tpu.memory_space<vmem>>) attributes {dimension_semantics = [#tpu.dimension_semantics<parallel>, #tpu.dimension_semantics<arbitrary>], iteration_bounds = array<i64: 1, 1>, scalar_prefetch = 0 : i64, scratch_operands = 3 : i64, tpu.core_type = #tpu.core_type<tc>, window_params = [{transform_indices = @transform_0, window_bounds = array<i64: 16, 128>}, {transform_indices = @transform_1, window_bounds = array<i64: 1, 128>}, {pipeline_mode = #tpu.pipeline_mode<synchronous>, transform_indices = @transform_2, window_bounds = array<i64: 16, 1>}, {pipeline_mode = #tpu.pipeline_mode<synchronous>, transform_indices = @transform_3, window_bounds = array<i64: 16, 1>}, {transform_indices = @transform_4, window_bounds = array<i64: 1, 16, 1>}, {transform_indices = @transform_5, window_bounds = array<i64: 1, 16, 1>}, {transform_indices = @transform_6, window_bounds = array<i64: 1, 16, 1>}]} {
    %c0_i32 = arith.constant 0 : i32
    %0 = arith.cmpi eq, %arg1, %c0_i32 : i32
    %1 = arith.extui %0 : i1 to i32
    %c0_i32_0 = arith.constant 0 : i32
    %2 = arith.cmpi ne, %1, %c0_i32_0 : i32
    scf.if %2 {
      %cst_26 = arith.constant 0.000000e+00 : f32
      %63 = vector.broadcast %cst_26 : f32 to vector<16x128xf32>
      %c0_27 = arith.constant 0 : index
      %c0_28 = arith.constant 0 : index
      %64 = vector.load %arg9[%c0_27, %c0_28] : memref<16x128xf32, #tpu.memory_space<vmem>>, vector<16x128xf32>
      tpu.vector_store %arg9[%c0_27, %c0_28], %63 {strides = array<i32>} : memref<16x128xf32, #tpu.memory_space<vmem>>, vector<16x128xf32>,
      %cst_29 = arith.constant 0.000000e+00 : f32
      %65 = vector.broadcast %cst_29 : f32 to vector<16x128xf32>
      %c0_30 = arith.constant 0 : index
      %c0_31 = arith.constant 0 : index
      %66 = vector.load %arg10[%c0_30, %c0_31] : memref<16x128xf32, #tpu.memory_space<vmem>>, vector<16x128xf32>
      tpu.vector_store %arg10[%c0_30, %c0_31], %65 {strides = array<i32>} : memref<16x128xf32, #tpu.memory_space<vmem>>, vector<16x128xf32>,
      %cst_32 = arith.constant 0.000000e+00 : f32
      %67 = vector.broadcast %cst_32 : f32 to vector<16x128xf32>
      %c0_33 = arith.constant 0 : index
      %c0_34 = arith.constant 0 : index
      %68 = vector.load %arg11[%c0_33, %c0_34] : memref<16x128xf32, #tpu.memory_space<vmem>>, vector<16x128xf32>
      tpu.vector_store %arg11[%c0_33, %c0_34], %67 {strides = array<i32>} : memref<16x128xf32, #tpu.memory_space<vmem>>, vector<16x128xf32>,
    } else {
    }
    %c0 = arith.constant 0 : index
    %c0_1 = arith.constant 0 : index
    %3 = vector.load %arg2[%c0, %c0_1] : memref<16x128xf32, #tpu.memory_space<vmem>>, vector<16x128xf32>
    %cst = arith.constant dense<0xFF800000> : vector<128xf32>
    %4 = vector.multi_reduction <maximumf>, %3, %cst [0] : vector<16x128xf32> to vector<128xf32>
    %5 = vector.shape_cast %4 : vector<128xf32> to vector<1x128xf32>
    %6 = vector.broadcast %5 : vector<1x128xf32> to vector<16x128xf32>
    %7 = arith.subf %3, %6 : vector<16x128xf32>
    %8 = math.exp %7 : vector<16x128xf32>
    %cst_2 = arith.constant dense<0.000000e+00> : vector<128xf32>
    %9 = vector.multi_reduction <add>, %8, %cst_2 [0] : vector<16x128xf32> to vector<128xf32>
    %10 = vector.shape_cast %9 : vector<128xf32> to vector<1x128xf32>
    %cst_3 = arith.constant 1.000000e+00 : f32
    %11 = vector.broadcast %cst_3 : f32 to vector<1x128xf32>
    %12 = arith.divf %11, %10 : vector<1x128xf32>
    %13 = tpu.iota {dimensions = array<i32: 0>} : vector<16x128xi32>
    %14 = vector.broadcast %5 : vector<1x128xf32> to vector<16x128xf32>
    %15 = arith.cmpf oeq, %3, %14 : vector<16x128xf32>
    %c16_i32 = arith.constant 16 : i32
    %16 = vector.broadcast %c16_i32 : i32 to vector<16x128xi32>
    %17 = arith.select %15, %13, %16 : vector<16x128xi1>, vector<16x128xi32>
    %cst_4 = arith.constant dense<2147483647> : vector<128xi32>
    %18 = vector.multi_reduction <minsi>, %17, %cst_4 [0] : vector<16x128xi32> to vector<128xi32>
    %19 = vector.shape_cast %18 : vector<128xi32> to vector<1x128xi32>
    %c0_5 = arith.constant 0 : index
    %c0_6 = arith.constant 0 : index
    %20 = vector.load %arg3[%c0_5, %c0_6] : memref<1x128xi32, #tpu.memory_space<vmem>>, vector<1x128xi32>
    %21 = arith.cmpi eq, %19, %20 : vector<1x128xi32>
    %22 = arith.extui %21 : vector<1x128xi1> to vector<1x128xi32>
    %23 = arith.sitofp %22 : vector<1x128xi32> to vector<1x128xf32>
    %c1_i32 = arith.constant 1 : i32
    %24 = arith.muli %arg0, %c1_i32 : i32
    %25 = arith.addi %24, %arg1 : i32
    %26 = tpu.iota {dimensions = array<i32: 1>} : vector<1x128xi32>
    %c128_i32 = arith.constant 128 : i32
    %27 = arith.muli %25, %c128_i32 : i32
    %28 = vector.broadcast %27 : i32 to vector<1x128xi32>
    %29 = arith.addi %28, %26 : vector<1x128xi32>
    %c128_i32_7 = arith.constant 128 : i32
    %30 = vector.broadcast %c128_i32_7 : i32 to vector<1x128xi32>
    %31 = arith.cmpi slt, %29, %30 : vector<1x128xi32>
    %32 = arith.extui %31 : vector<1x128xi1> to vector<1x128xi32>
    %33 = arith.sitofp %32 : vector<1x128xi32> to vector<1x128xf32>
    %c0_8 = arith.constant 0 : index
    %c0_9 = arith.constant 0 : index
    %34 = vector.load %arg4[%c0_8, %c0_9] : memref<16x1xf32, #tpu.memory_space<vmem>>, vector<16x1xf32>
    %c0_10 = arith.constant 0 : index
    %c0_11 = arith.constant 0 : index
    %35 = vector.load %arg5[%c0_10, %c0_11] : memref<16x1xf32, #tpu.memory_space<vmem>>, vector<16x1xf32>
    %36 = vector.broadcast %12 : vector<1x128xf32> to vector<16x128xf32>
    %37 = vector.broadcast %34 : vector<16x1xf32> to vector<16x128xf32>
    %38 = arith.cmpf ogt, %36, %37 : vector<16x128xf32>
    %39 = vector.broadcast %12 : vector<1x128xf32> to vector<16x128xf32>
    %40 = vector.broadcast %35 : vector<16x1xf32> to vector<16x128xf32>
    %41 = arith.cmpf ole, %39, %40 : vector<16x128xf32>
    %42 = arith.andi %38, %41 : vector<16x128xi1>
    %43 = arith.extui %42 : vector<16x128xi1> to vector<16x128xi32>
    %44 = arith.sitofp %43 : vector<16x128xi32> to vector<16x128xf32>
    %45 = vector.broadcast %33 : vector<1x128xf32> to vector<16x128xf32>
    %46 = arith.mulf %44, %45 : vector<16x128xf32>
    %c0_12 = arith.constant 0 : index
    %c0_13 = arith.constant 0 : index
    %47 = vector.load %arg9[%c0_12, %c0_13] : memref<16x128xf32, #tpu.memory_space<vmem>>, vector<16x128xf32>
    %48 = arith.addf %47, %46 : vector<16x128xf32>
    %c0_14 = arith.constant 0 : index
    %c0_15 = arith.constant 0 : index
    %49 = vector.load %arg9[%c0_14, %c0_15] : memref<16x128xf32, #tpu.memory_space<vmem>>, vector<16x128xf32>
    tpu.vector_store %arg9[%c0_14, %c0_15], %48 {strides = array<i32>} : memref<16x128xf32, #tpu.memory_space<vmem>>, vector<16x128xf32>,
    %c0_16 = arith.constant 0 : index
    %c0_17 = arith.constant 0 : index
    %50 = vector.load %arg10[%c0_16, %c0_17] : memref<16x128xf32, #tpu.memory_space<vmem>>, vector<16x128xf32>
    %51 = vector.broadcast %12 : vector<1x128xf32> to vector<16x128xf32>
    %52 = arith.mulf %46, %51 : vector<16x128xf32>
    %53 = arith.addf %50, %52 : vector<16x128xf32>
    %c0_18 = arith.constant 0 : index
    %c0_19 = arith.constant 0 : index
    %54 = vector.load %arg10[%c0_18, %c0_19] : memref<16x128xf32, #tpu.memory_space<vmem>>, vector<16x128xf32>
    tpu.vector_store %arg10[%c0_18, %c0_19], %53 {strides = array<i32>} : memref<16x128xf32, #tpu.memory_space<vmem>>, vector<16x128xf32>,
    %c0_20 = arith.constant 0 : index
    %c0_21 = arith.constant 0 : index
    %55 = vector.load %arg11[%c0_20, %c0_21] : memref<16x128xf32, #tpu.memory_space<vmem>>, vector<16x128xf32>
    %56 = vector.broadcast %23 : vector<1x128xf32> to vector<16x128xf32>
    %57 = arith.mulf %46, %56 : vector<16x128xf32>
    %58 = arith.addf %55, %57 : vector<16x128xf32>
    %c0_22 = arith.constant 0 : index
    %c0_23 = arith.constant 0 : index
    %59 = vector.load %arg11[%c0_22, %c0_23] : memref<16x128xf32, #tpu.memory_space<vmem>>, vector<16x128xf32>
    tpu.vector_store %arg11[%c0_22, %c0_23], %58 {strides = array<i32>} : memref<16x128xf32, #tpu.memory_space<vmem>>, vector<16x128xf32>,
    %c0_i32_24 = arith.constant 0 : i32
    %60 = arith.cmpi eq, %arg1, %c0_i32_24 : i32
    %61 = arith.extui %60 : i1 to i32
    %c0_i32_25 = arith.constant 0 : i32
    %62 = arith.cmpi ne, %61, %c0_i32_25 : i32
    scf.if %62 {
      %c0_26 = arith.constant 0 : index
      %c0_27 = arith.constant 0 : index
      %63 = vector.load %arg9[%c0_26, %c0_27] : memref<16x128xf32, #tpu.memory_space<vmem>>, vector<16x128xf32>
      %cst_28 = arith.constant dense<0.000000e+00> : vector<16xf32>
      %64 = vector.multi_reduction <add>, %63, %cst_28 [1] : vector<16x128xf32> to vector<16xf32>
      %65 = vector.shape_cast %64 : vector<16xf32> to vector<16x1xf32>
      %c0_29 = arith.constant 0 : index
      %c0_30 = arith.constant 0 : index
      %c0_31 = arith.constant 0 : index
      %66 = vector.load %arg6[%c0_29, %c0_30, %c0_31] : memref<1x16x1xf32, #tpu.memory_space<vmem>>, vector<1x16x1xf32>
      %67 = vector.shape_cast %66 : vector<1x16x1xf32> to vector<16x1xf32>
      %68 = vector.shape_cast %65 : vector<16x1xf32> to vector<1x16x1xf32>
      tpu.vector_store %arg6[%c0_29, %c0_30, %c0_31], %68 {strides = array<i32>} : memref<1x16x1xf32, #tpu.memory_space<vmem>>, vector<1x16x1xf32>,
      %c0_32 = arith.constant 0 : index
      %c0_33 = arith.constant 0 : index
      %69 = vector.load %arg10[%c0_32, %c0_33] : memref<16x128xf32, #tpu.memory_space<vmem>>, vector<16x128xf32>
      %cst_34 = arith.constant dense<0.000000e+00> : vector<16xf32>
      %70 = vector.multi_reduction <add>, %69, %cst_34 [1] : vector<16x128xf32> to vector<16xf32>
      %71 = vector.shape_cast %70 : vector<16xf32> to vector<16x1xf32>
      %c0_35 = arith.constant 0 : index
      %c0_36 = arith.constant 0 : index
      %c0_37 = arith.constant 0 : index
      %72 = vector.load %arg7[%c0_35, %c0_36, %c0_37] : memref<1x16x1xf32, #tpu.memory_space<vmem>>, vector<1x16x1xf32>
      %73 = vector.shape_cast %72 : vector<1x16x1xf32> to vector<16x1xf32>
      %74 = vector.shape_cast %71 : vector<16x1xf32> to vector<1x16x1xf32>
      tpu.vector_store %arg7[%c0_35, %c0_36, %c0_37], %74 {strides = array<i32>} : memref<1x16x1xf32, #tpu.memory_space<vmem>>, vector<1x16x1xf32>,
      %c0_38 = arith.constant 0 : index
      %c0_39 = arith.constant 0 : index
      %75 = vector.load %arg11[%c0_38, %c0_39] : memref<16x128xf32, #tpu.memory_space<vmem>>, vector<16x128xf32>
      %cst_40 = arith.constant dense<0.000000e+00> : vector<16xf32>
      %76 = vector.multi_reduction <add>, %75, %cst_40 [1] : vector<16x128xf32> to vector<16xf32>
      %77 = vector.shape_cast %76 : vector<16xf32> to vector<16x1xf32>
      %c0_41 = arith.constant 0 : index
      %c0_42 = arith.constant 0 : index
      %c0_43 = arith.constant 0 : index
      %78 = vector.load %arg8[%c0_41, %c0_42, %c0_43] : memref<1x16x1xf32, #tpu.memory_space<vmem>>, vector<1x16x1xf32>
      %79 = vector.shape_cast %78 : vector<1x16x1xf32> to vector<16x1xf32>
      %80 = vector.shape_cast %77 : vector<16x1xf32> to vector<1x16x1xf32>
      tpu.vector_store %arg8[%c0_41, %c0_42, %c0_43], %80 {strides = array<i32>} : memref<1x16x1xf32, #tpu.memory_space<vmem>>, vector<1x16x1xf32>,
    } else {
    }
    return
  }
  func.func @transform_0(%arg0: i32, %arg1: i32) -> (i32, i32) {
    %c1_i32 = arith.constant 1 : i32
    %0 = arith.muli %arg0, %c1_i32 : i32
    %1 = arith.addi %0, %arg1 : i32
    %c0_i32 = arith.constant 0 : i32
    %c0_i32_0 = arith.constant 0 : i32
    return %c0_i32, %1 : i32, i32
  }
  func.func @transform_1(%arg0: i32, %arg1: i32) -> (i32, i32) {
    %c1_i32 = arith.constant 1 : i32
    %0 = arith.muli %arg0, %c1_i32 : i32
    %1 = arith.addi %0, %arg1 : i32
    %c0_i32 = arith.constant 0 : i32
    %c0_i32_0 = arith.constant 0 : i32
    return %c0_i32, %1 : i32, i32
  }
  func.func @transform_2(%arg0: i32, %arg1: i32) -> (i32, i32) {
    %c0_i32 = arith.constant 0 : i32
    %c0_i32_0 = arith.constant 0 : i32
    %c0_i32_1 = arith.constant 0 : i32
    return %c0_i32, %c0_i32_0 : i32, i32
  }
  func.func @transform_3(%arg0: i32, %arg1: i32) -> (i32, i32) {
    %c0_i32 = arith.constant 0 : i32
    %c0_i32_0 = arith.constant 0 : i32
    %c0_i32_1 = arith.constant 0 : i32
    return %c0_i32, %c0_i32_0 : i32, i32
  }
  func.func @transform_4(%arg0: i32, %arg1: i32) -> (i32, i32, i32) {
    %c0_i32 = arith.constant 0 : i32
    %c0_i32_0 = arith.constant 0 : i32
    %c0_i32_1 = arith.constant 0 : i32
    return %arg0, %c0_i32, %c0_i32_0 : i32, i32, i32
  }
  func.func @transform_5(%arg0: i32, %arg1: i32) -> (i32, i32, i32) {
    %c0_i32 = arith.constant 0 : i32
    %c0_i32_0 = arith.constant 0 : i32
    %c0_i32_1 = arith.constant 0 : i32
    return %arg0, %c0_i32, %c0_i32_0 : i32, i32, i32
  }
  func.func @transform_6(%arg0: i32, %arg1: i32) -> (i32, i32, i32) {
    %c0_i32 = arith.constant 0 : i32
    %c0_i32_0 = arith.constant 0 : i32
    %c0_i32_1 = arith.constant 0 : i32
    return %arg0, %c0_i32, %c0_i32_0 : i32, i32, i32
  }
}

</mosaic_0001>

<llo_original>
// kernel: tpu_custom_call.1
$region0: #{tpu_custom_call.1}
  #allocation0 [shape = 'u32[]', space=smem, size = 0x4, offset = 0x4, fixed_abs, tag = 'smem constant byte address 0x4 - core index']
  #allocation1 [shape = 'u32[144,128]{1,0:T(1,128)}', space=vmem, size = 0x12000, scoped, tag = 'internal scratch']
  #allocation2 [shape = 'f32[16,128]{1,0:T(8,128)}', space=vmem, size = 0x2000, scoped, tag = 'scratch operand']
  #allocation3 [shape = 'f32[16,128]{1,0:T(8,128)}', space=vmem, size = 0x2000, scoped, tag = 'scratch operand']
  #allocation4 [shape = 'f32[16,128]{1,0:T(8,128)}', space=vmem, size = 0x2000, scoped, tag = 'scratch operand']
  %s0 = inlined_call_operand.vmem [shape: f32[16,128], index: 0, kind: input, shape index: {}]
  %s1 = inlined_call_operand.vmem [shape: s32[1,128], index: 1, kind: input, shape index: {}]
  %s2 = inlined_call_operand.vmem [shape: f32[16,1], index: 2, kind: input, shape index: {}]
  %s3 = inlined_call_operand.vmem [shape: f32[16,1], index: 3, kind: input, shape index: {}]
  %s4 = inlined_call_operand.vmem [shape: f32[1,16,1], index: 4, kind: output, shape index: {0}]
  %s5 = inlined_call_operand.vmem [shape: f32[1,16,1], index: 5, kind: output, shape index: {1}]
  %s6 = inlined_call_operand.vmem [shape: f32[1,16,1], index: 6, kind: output, shape index: {2}]
  %7 = xla_tuple %s4, %s5, %s6
  %s8 = sld [smem:[#allocation0]]
  $region50: #{tpu_custom_call.1} parent=0
    _
  %s10 = ssub.s32 1, %s8
  %s11 = scalar_select 0, %s10, %s8
  // Predicated region
  $region2: #{tpu_custom_call.1} parent=0 // pred_check
    _
  $region3: #{tpu_custom_call.1} parent=0 // pred_check_branch
    %13 = sbr.rel (0) target = $region5
  $region4: #{tpu_custom_call.1} parent=0 // pred_region
    %s14 = sadd.s32 0, 0
    %p15 = scmp.lt.s32.totalorder %s14, 0
    %s16 = scalar_select %p15, %s14, 0
    %s17 = smul.addr %s16, 8
    %s18 = scalar_lea.vmem %s0, %s17
    %s19 = sadd.s32 0, 0
  $region5: #{tpu_custom_call.1} parent=0 // pred_fallthru
    _
  // Predicated region
  $region6: #{tpu_custom_call.1} parent=0 // pred_check
    _
  $region7: #{tpu_custom_call.1} parent=0 // pred_check_branch
    %21 = sbr.rel (0) target = $region9
  $region8: #{tpu_custom_call.1} parent=0 // pred_region
    %s22 = sadd.s32 0, 0
    %p23 = scmp.lt.s32.totalorder %s22, 0
    %s24 = scalar_select %p23, %s22, 0
    %s25 = scalar_lea.vmem %s1, %s24
    %s26 = sadd.s32 0, 0
  $region9: #{tpu_custom_call.1} parent=0 // pred_fallthru
    _
  // Predicated region
  $region10: #{tpu_custom_call.1} parent=0 // pred_check
    _
  $region11: #{tpu_custom_call.1} parent=0 // pred_check_branch
    %28 = sbr.rel (0) target = $region13
  $region12: #{tpu_custom_call.1} parent=0 // pred_region
    _
  $region13: #{tpu_custom_call.1} parent=0 // pred_fallthru
    _
  // Predicated region
  $region14: #{tpu_custom_call.1} parent=0 // pred_check
    _
  $region15: #{tpu_custom_call.1} parent=0 // pred_check_branch
    %30 = sbr.rel (0) target = $region17
  $region16: #{tpu_custom_call.1} parent=0 // pred_region
    _
  $region17: #{tpu_custom_call.1} parent=0 // pred_fallthru
    _
  %s31 = sadd.s32 0, 0
  %p32 = scmp.lt.s32.totalorder %s31, 0
  %s33 = scalar_select %p32, %s31, 0
  %s34 = smul.addr %s33, 8
  %s35 = scalar_lea.vmem %s0, %s34
  %s36 = sadd.s32 0, 0
  %p37 = scmp.lt.s32.totalorder %s36, 0
  %s38 = scalar_select %p37, %s36, 0
  %s39 = scalar_lea.vmem %s1, %s38
  %s40 = sadd.s32 0, 0
  %p41 = scmp.lt.s32.totalorder %s40, 0
  %s42 = scalar_select %p41, %s40, 0
  %s43 = smul.addr %s42, 8
  %s44 = scalar_lea.vmem %s0, %s43
  %s45 = sadd.s32 0, 0
  %s46 = sadd.s32 0, 0
  %p47 = scmp.lt.s32.totalorder %s46, 0
  %s48 = scalar_select %p47, %s46, 0
  %s49 = scalar_lea.vmem %s1, %s48
  %s50 = sadd.s32 0, 0
  %p51 = scmp.eq.s32.totalorder 0, 0
  // Predicated region
  $region18: #{tpu_custom_call.1} parent=0 // pred_check
    %p52 = pneg %p51
  $region19: #{tpu_custom_call.1} parent=0 // pred_check_branch
    %54 = sbr.rel (%p52) target = $region21
  $region20: #{tpu_custom_call.1} parent=0 // pred_region
    %55 = vst [vmem:[#allocation2] sm:$0xff] 0.0
    %56 = vst [vmem:[#allocation2 + $0x8] sm:$0xff] 0.0
    %57 = vst [vmem:[#allocation3] sm:$0xff] 0.0
    %58 = vst [vmem:[#allocation3 + $0x8] sm:$0xff] 0.0
    %59 = vst [vmem:[#allocation4] sm:$0xff] 0.0
    %60 = vst [vmem:[#allocation4 + $0x8] sm:$0xff] 0.0
  $region21: #{tpu_custom_call.1} parent=0 // pred_fallthru
    _
  %v61 = vld [vmem:[%s44] sm:$0xff]
  %v62 = vld [vmem:[%s44 + $0x8] sm:$0xff]
  %v63 = vmax.f32 %v61, %v62
  %v64 = vrot.slane %v63, 4
  %v65 = vmax.f32 %v63, %v64
  %v66 = vrot.slane %v65, 2
  %v67 = vmax.f32 %v65, %v66
  %v68 = vrot.slane %v67, 1
  %v69 = vmax.f32 %v67, %v68
  %v70 = vsub.f32 %v61, %v69
  %v71 = vsub.f32 %v62, %v69
  %v72 = vmul.f32 %v70, 1.442695
  %v73 = vpow.pop %v72
  %v74 = vmul.f32 %v71, 1.442695
  %v75 = vpow.pop %v74
  %v76 = vadd.f32 %v73, %v75
  %v77 = vrot.slane %v76, 4
  %v78 = vadd.f32 %v76, %v77
  %v79 = vrot.slane %v78, 2
  %v80 = vadd.f32 %v78, %v79
  %v81 = vrot.slane %v80, 1
  %v82 = vadd.f32 %v80, %v81
  %v83 = vrcp.pop %v82
  %v84 = vmul.f32 1.0, %v83
  %v85 = vlaneseq
  %v86 = vshrl.u32 %v85, 7
  %v87 = vadd.s32 %v86, 8
  %vm88 = vcmp.eq.f32.partialorder %v61, %v69
  %vm89 = vcmp.eq.f32.partialorder %v62, %v69
  %v90 = vsel %vm88, %v86, 16
  %v91 = vsel %vm89, %v87, 16
  %vm92 = vcmp.lt.s32.totalorder %v90, %v91
  %v93 = vsel %vm92, %v90, %v91
  %v94 = vrot.slane %v93, 4
  %vm95 = vcmp.lt.s32.totalorder %v93, %v94
  %v96 = vsel %vm95, %v93, %v94
  %v97 = vrot.slane %v96, 2
  %vm98 = vcmp.lt.s32.totalorder %v96, %v97
  %v99 = vsel %vm98, %v96, %v97
  %v100 = vrot.slane %v99, 1
  %vm101 = vcmp.lt.s32.totalorder %v99, %v100
  %v102 = vsel %vm101, %v99, %v100
  %v103 = vld [vmem:[%s49] sm:$0x1]
  %vm104 = vcmp.eq.s32.totalorder %v102, %v103
  %v105 = vsel %vm104, 1, 0
  %v106 = vcvt.s32.f32 %v105
  %s107 = sadd.s32 0, 0
  %v108 = vlaneseq
  %v109 = vand.u32 %v108, 127
  %s110 = smul.u32 %s107, 128
  %v111 = vstv %s110
  %v112 = vadd.s32 %v111, %v109
  %vm113 = vcmp.lt.s32.totalorder %v112, 128
  %v114 = vsel %vm113, 1, 0
  %v115 = vcvt.s32.f32 %v114
  %v116 = vld [vmem:[%s2] sm:$0xff]
  %v117 = vld [vmem:[%s2 + $0x8] sm:$0xff]
  %v118 = vld [vmem:[%s3] sm:$0xff]
  %v119 = vld [vmem:[%s3 + $0x8] sm:$0xff]
  %121 = vset.pattern.permute.xlu0 0
  %122 = vperm.xlu0 %121, %v116
  %v123 = vpop.permute.xlu0 %122
  %126 = vset.pattern.permute.xlu0 0
  %127 = vperm.xlu0 %126, %v117
  %v128 = vpop.permute.xlu0 %127
  %vm130 = vcmp.gt.f32.partialorder %v84, %v123
  %vm131 = vcmp.gt.f32.partialorder %v84, %v128
  %133 = vset.pattern.permute.xlu0 0
  %134 = vperm.xlu0 %133, %v118
  %v135 = vpop.permute.xlu0 %134
  %138 = vset.pattern.permute.xlu0 0
  %139 = vperm.xlu0 %138, %v119
  %v140 = vpop.permute.xlu0 %139
  %vm142 = vcmp.le.f32.partialorder %v84, %v135
  %vm143 = vcmp.le.f32.partialorder %v84, %v140
  %vm144 = vmand %vm130, %vm142
  %vm145 = vmand %vm131, %vm143
  %v146 = vsel %vm144, 1, 0
  %v147 = vsel %vm145, 1, 0
  %v148 = vcvt.s32.f32 %v146
  %v149 = vcvt.s32.f32 %v147
  %v150 = vmul.f32 %v148, %v115
  %v151 = vmul.f32 %v149, %v115
  %v152 = vld [vmem:[#allocation2] sm:$0xff]
  %v153 = vld [vmem:[#allocation2 + $0x8] sm:$0xff]
  %v154 = vadd.f32 %v152, %v150
  %v155 = vadd.f32 %v153, %v151
  %156 = vst [vmem:[#allocation2] sm:$0xff] %v154
  %157 = vst [vmem:[#allocation2 + $0x8] sm:$0xff] %v155
  %v158 = vld [vmem:[#allocation3] sm:$0xff]
  %v159 = vld [vmem:[#allocation3 + $0x8] sm:$0xff]
  %v160 = vmul.f32 %v150, %v84
  %v161 = vmul.f32 %v151, %v84
  %v162 = vadd.f32 %v158, %v160
  %v163 = vadd.f32 %v159, %v161
  %164 = vst [vmem:[#allocation3] sm:$0xff] %v162
  %165 = vst [vmem:[#allocation3 + $0x8] sm:$0xff] %v163
  %v166 = vld [vmem:[#allocation4] sm:$0xff]
  %v167 = vld [vmem:[#allocation4 + $0x8] sm:$0xff]
  %v168 = vlaneseq
  %v169 = vshrl.u32 %v168, 7
  %v170 = vsub.s32 0, %v169
  %v171 = vrot.slane %v106, %v170
  %v172 = vmul.f32 %v150, %v171
  %v173 = vmul.f32 %v151, %v171
  %v174 = vadd.f32 %v166, %v172
  %v175 = vadd.f32 %v167, %v173
  %176 = vst [vmem:[#allocation4] sm:$0xff] %v174
  %177 = vst [vmem:[#allocation4 + $0x8] sm:$0xff] %v175
  // Predicated region
  $region22: #{tpu_custom_call.1} parent=0 // pred_check
    %p178 = pneg %p51
  $region23: #{tpu_custom_call.1} parent=0 // pred_check_branch
    %180 = sbr.rel (%p178) target = $region25
  $region24: #{tpu_custom_call.1} parent=0 // pred_region
    %v181 = vld [vmem:[#allocation2] sm:$0xff]
    %v182 = vld [vmem:[#allocation2 + $0x8] sm:$0xff]
    %183 = vadd.xlane.f32.xlu0 %v181
    %v184 = vpop.xlane.xlu0 %183
    %185 = vadd.xlane.f32.xlu0 %v182
    %v186 = vpop.xlane.xlu0 %185
    %vm187 = vcmask 7168
    %188 = vst.msk [vmem:[%s4] sm:$0xff] %vm187, %v184
    %189 = vst.msk [vmem:[%s4 + $0x8] sm:$0xff] %vm187, %v186
    %v190 = vld [vmem:[#allocation3] sm:$0xff]
    %v191 = vld [vmem:[#allocation3 + $0x8] sm:$0xff]
    %192 = vadd.xlane.f32.xlu0 %v190
    %v193 = vpop.xlane.xlu0 %192
    %194 = vadd.xlane.f32.xlu0 %v191
    %v195 = vpop.xlane.xlu0 %194
    %196 = vst.msk [vmem:[%s5] sm:$0xff] %vm187, %v193
    %197 = vst.msk [vmem:[%s5 + $0x8] sm:$0xff] %vm187, %v195
    %v198 = vld [vmem:[#allocation4] sm:$0xff]
    %v199 = vld [vmem:[#allocation4 + $0x8] sm:$0xff]
    %200 = vadd.xlane.f32.xlu0 %v198
    %v201 = vpop.xlane.xlu0 %200
    %202 = vadd.xlane.f32.xlu0 %v199
    %v203 = vpop.xlane.xlu0 %202
    %204 = vst.msk [vmem:[%s6] sm:$0xff] %vm187, %v201
    %205 = vst.msk [vmem:[%s6 + $0x8] sm:$0xff] %vm187, %v203
  $region25: #{tpu_custom_call.1} parent=0 // pred_fallthru
    _
  // Predicated region
  $region26: #{tpu_custom_call.1} parent=0 // pred_check
    _
  $region27: #{tpu_custom_call.1} parent=0 // pred_check_branch
    %207 = sbr.rel (0) target = $region29
  $region28: #{tpu_custom_call.1} parent=0 // pred_region
    _
  $region29: #{tpu_custom_call.1} parent=0 // pred_fallthru
    _
  // Predicated region
  $region30: #{tpu_custom_call.1} parent=0 // pred_check
    _
  $region31: #{tpu_custom_call.1} parent=0 // pred_check_branch
    %209 = sbr.rel (0) target = $region33
  $region32: #{tpu_custom_call.1} parent=0 // pred_region
    _
  $region33: #{tpu_custom_call.1} parent=0 // pred_fallthru
    _
  // Predicated region
  $region34: #{tpu_custom_call.1} parent=0 // pred_check
    _
  $region35: #{tpu_custom_call.1} parent=0 // pred_check_branch
    %211 = sbr.rel (0) target = $region37
  $region36: #{tpu_custom_call.1} parent=0 // pred_region
    _
  $region37: #{tpu_custom_call.1} parent=0 // pred_fallthru
    _
  // Predicated region
  $region38: #{tpu_custom_call.1} parent=0 // pred_check
    _
  $region39: #{tpu_custom_call.1} parent=0 // pred_check_branch
    %213 = sbr.rel (0) target = $region41
  $region40: #{tpu_custom_call.1} parent=0 // pred_region
    _
  $region41: #{tpu_custom_call.1} parent=0 // pred_fallthru
    _
  // Predicated region
  $region42: #{tpu_custom_call.1} parent=0 // pred_check
    _
  $region43: #{tpu_custom_call.1} parent=0 // pred_check_branch
    %215 = sbr.rel (0) target = $region45
  $region44: #{tpu_custom_call.1} parent=0 // pred_region
    _
  $region45: #{tpu_custom_call.1} parent=0 // pred_fallthru
    _
  // Predicated region
  $region46: #{tpu_custom_call.1} parent=0 // pred_check
    _
  $region47: #{tpu_custom_call.1} parent=0 // pred_check_branch
    %217 = sbr.rel (0) target = $region49
  $region48: #{tpu_custom_call.1} parent=0 // pred_region
    _
  $region49: #{tpu_custom_call.1} parent=0 // pred_fallthru
    _

</llo_original>
